<compile_context>
chip_gen: v6e
topology: v6e:2x2x1
jax: 0.10.0
libtpu: 0.0.40
codegen_flags: <defaults>
</compile_context>

<pallas_src>
import functools

import jax
import jax.numpy as jnp
from jax.experimental import pallas as pl
from jax.experimental.pallas import tpu as pltpu


def _multi_locality_kernel(q_ref, k_ref, hq_ref, hk_ref, wq_ref, wk_ref,
                           bq_ref, bk_ref, mw_ref, mb_ref,
                           oq_ref, ok_ref, lq_ref, lk_ref,
                           *, n_sizes, max_sz):
    _, T, C = q_ref.shape
    H = hq_ref.shape[1]          # halo rows (>= max_sz - 1)
    P = max_sz - 1

    q = q_ref[0]                 # (T, C) f32 -- also feeds the softmax mix
    k = k_ref[0]

    # ---- causal halo: last H rows of the previous time tile, zero at tile 0 --
    if P > 0:
        is_first = pl.program_id(1) == 0
        hq = jnp.where(is_first, 0.0, hq_ref[0])     # (H, C); zeros == causal pad
        hk = jnp.where(is_first, 0.0, hk_ref[0])

    # ---- im2col straight into persistent VMEM scratch (T, max_sz*C) ----------
    # column block t holds x[i + t - P]; each element is written exactly once.
    for t in range(max_sz):
        nh = P - t                                   # halo rows feeding tap t
        lo, hi = t * C, (t + 1) * C
        if nh > 0:
            lq_ref[0:nh, lo:hi] = hq[H - nh:, :]
            lk_ref[0:nh, lo:hi] = hk[H - nh:, :]
            lq_ref[nh:, lo:hi] = q[:T - nh, :]
            lk_ref[nh:, lo:hi] = k[:T - nh, :]
        else:
            lq_ref[:, lo:hi] = q
            lk_ref[:, lo:hi] = k

    # ---- one fused bf16 MXU matmul per stream (f32 acc), bias in the epilogue
    conv_q = jnp.dot(lq_ref[...].astype(jnp.bfloat16), wq_ref[...],
                     preferred_element_type=jnp.float32) + bq_ref[...]
    conv_k = jnp.dot(lk_ref[...].astype(jnp.bfloat16), wk_ref[...],
                     preferred_element_type=jnp.float32) + bk_ref[...]

    # ---- softmax mixing weights over kernel sizes: single online pass --------
    logits = [q * mw_ref[j] + mb_ref[j] for j in range(n_sizes)]
    m = logits[0]
    for j in range(1, n_sizes):
        m = jnp.maximum(m, logits[j])
    denom = jnp.zeros((T, C), jnp.float32)
    out_q = jnp.zeros((T, C), jnp.float32)
    out_k = jnp.zeros((T, C), jnp.float32)
    for j in range(n_sizes):
        e = jnp.exp(logits[j] - m)                   # one EUP exp per size
        denom = denom + e
        out_q = out_q + e * conv_q[:, j * C:(j + 1) * C]
        out_k = out_k + e * conv_k[:, j * C:(j + 1) * C]
    inv = pl.reciprocal(denom, approx=True)
    oq_ref[0] = (out_q * inv).astype(oq_ref.dtype)
    ok_ref[0] = (out_k * inv).astype(ok_ref.dtype)


def _round_up(x, m):
    return ((x + m - 1) // m) * m


def _choose_tiling(L, max_sz, time_tile):
    """Pick (T, H, n_t, Lp): time tile, halo rows, #time tiles, padded length."""
    P = max(max_sz - 1, 1)
    if L <= time_tile:
        T = L
        H = min(_round_up(P, 8), T)
        return T, H, 1, L
    H = _round_up(P, 8)
    t_max = (time_tile // H) * H
    assert t_max >= H, "time_tile too small for the largest kernel size"
    # Prefer a tile that divides L so the wrapper never pads / re-slices HBM.
    T = t_max
    floor = max(H, t_max // 2)
    cand = t_max
    while cand >= floor:
        if L % cand == 0:
            T = cand
            break
        cand -= H
    Lp = _round_up(L, T)
    return T, H, Lp // T, Lp


def _vmem_limit_bytes(T, C, n_sizes, max_sz, H):
    """Working-set based VMEM budget (with headroom), capped per generation."""
    f32, bf16 = 4, 2
    act = 4 * 2 * T * C * f32                          # q,k,out_q,out_k double-buffered
    halo = 2 * 2 * H * C * f32
    wgt = 2 * 2 * (max_sz * C) * (n_sizes * C) * bf16
    small = 4 * 2 * n_sizes * C * f32                   # biases + mix params
    scratch = 2 * T * (max_sz * C) * f32                # persistent im2col scratch
    tmp = (2 * T * (n_sizes * C) * f32                  # conv results
           + 2 * T * (max_sz * C) * bf16                # bf16 MXU operands
           + 8 * T * C * f32)                           # mix / output temporaries
    need = act + halo + wgt + small + scratch + tmp
    budget = int(need * 1.5) + (8 << 20)                # headroom + compiler scratch
    try:
        cap = int(pltpu.get_tpu_info().vmem_capacity_bytes * 0.85)
    except Exception:
        cap = 48 << 20                                  # safe on v5e/v6e/v7x
    return min(max(budget, 32 << 20), cap)


def multi_locality_forward(queries, keys, params, kernel_sizes, *,
                           time_tile=512, out_dtype=jnp.float32):
    """queries, keys: (B, L, C) float32. Returns (out_q, out_k), each (B, L, C)."""
    B, L, C = queries.shape
    kernel_sizes = tuple(int(s) for s in kernel_sizes)
    n_sizes = len(kernel_sizes)
    max_sz = max(kernel_sizes)
    assert L >= max_sz, "sequence must be at least as long as the largest kernel"

    T, H, n_t, Lp = _choose_tiling(L, max_sz, time_tile)
    assert T >= max_sz
    if Lp != L:
        # TODO(synk): fallback only when no multiple-of-H tile divides L; this
        # costs one extra HBM pass (pad here + slice below).
        queries = jnp.pad(queries, ((0, 0), (0, Lp - L), (0, 0)))
        keys = jnp.pad(keys, ((0, 0), (0, Lp - L), (0, 0)))

    # Pack per-size Conv1d weights (C_out, C_in, sz) into one fused RHS of
    # shape (max_sz*C_in, n_sizes*C_out): taps along K (right-aligned, unused
    # taps zero), sizes along N.  bf16 operands, f32 MXU accumulation.
    def pack(weight_list):
        packed = jnp.zeros((max_sz, C, n_sizes, C), jnp.float32)
        for j, sz in enumerate(kernel_sizes):
            wt = jnp.transpose(weight_list[j], (2, 1, 0))     # (sz, C_in, C_out)
            packed = packed.at[max_sz - sz:, :, j, :].set(wt)
        return packed.reshape(max_sz * C, n_sizes * C).astype(jnp.bfloat16)

    wq_packed = pack(params['wq'])
    wk_packed = pack(params['wk'])
    bq = jnp.concatenate([b.reshape(1, C) for b in params['bq']], axis=1)  # (1, n*C)
    bk = jnp.concatenate([b.reshape(1, C) for b in params['bk']], axis=1)
    lin_w = params['lin_w'].reshape(n_sizes).astype(jnp.float32)
    lin_b = params['lin_b'].reshape(n_sizes).astype(jnp.float32)
    # Broadcast the 1->n Linear params along lanes so no SMEM scalar reads needed.
    mixw = jnp.broadcast_to(lin_w[:, None, None], (n_sizes, 1, C))
    mixb = jnp.broadcast_to(lin_b[:, None, None], (n_sizes, 1, C))

    tpb = max(T // H, 1)     # halo blocks per time tile (T % H == 0 when n_t > 1)
    act_spec = pl.BlockSpec((1, T, C), lambda b, i: (b, i, 0))
    halo_spec = pl.BlockSpec((1, H, C),
                             lambda b, i: (b, jnp.maximum(i * tpb - 1, 0), 0))
    w_spec = pl.BlockSpec((max_sz * C, n_sizes * C), lambda b, i: (0, 0))
    b_spec = pl.BlockSpec((1, n_sizes * C), lambda b, i: (0, 0))
    mix_spec = pl.BlockSpec((n_sizes, 1, C), lambda b, i: (0, 0, 0))

    kernel = functools.partial(_multi_locality_kernel,
                               n_sizes=n_sizes, max_sz=max_sz)

    grid_spec = pltpu.PrefetchScalarGridSpec(
        num_scalar_prefetch=0,
        grid=(B, n_t),
        in_specs=[act_spec, act_spec, halo_spec, halo_spec,
                  w_spec, w_spec, b_spec, b_spec, mix_spec, mix_spec],
        out_specs=(act_spec, act_spec),
        scratch_shapes=[pltpu.VMEM((T, max_sz * C), jnp.float32),
                        pltpu.VMEM((T, max_sz * C), jnp.float32)],
    )

    out_q, out_k = pl.pallas_call(
        kernel,
        out_shape=(jax.ShapeDtypeStruct((B, Lp, C), out_dtype),
                   jax.ShapeDtypeStruct((B, Lp, C), out_dtype)),
        grid_spec=grid_spec,
        compiler_params=pltpu.CompilerParams(
            # No carried state across time tiles any more -> both axes parallel.
            dimension_semantics=("parallel", "parallel"),
            vmem_limit_bytes=_vmem_limit_bytes(T, C, n_sizes, max_sz, H)),
    )(queries, keys, queries, keys, wq_packed, wk_packed, bq, bk, mixw, mixb)

    if Lp != L:
        out_q = out_q[:, :L]
        out_k = out_k[:, :L]
    return out_q, out_k


def init_params(key, kernel_sizes, c_in, c_out):
    assert c_in == c_out, "multi_locality broadcasting requires in_channel == out_channel"
    ks = list(kernel_sizes)
    n = len(ks)
    subkeys = jax.random.split(key, 4 * n + 2)
    return {
        'wq': [0.3 * jax.random.normal(subkeys[j], (c_out, c_in, ks[j]), jnp.float32)
               for j in range(n)],
        'bq': [0.1 * jax.random.normal(subkeys[n + j], (c_out,), jnp.float32)
               for j in range(n)],
        'wk': [0.3 * jax.random.normal(subkeys[2 * n + j], (c_out, c_in, ks[j]), jnp.float32)
               for j in range(n)],
        'bk': [0.1 * jax.random.normal(subkeys[3 * n + j], (c_out,), jnp.float32)
               for j in range(n)],
        'lin_w': jax.random.normal(subkeys[4 * n], (n, 1), jnp.float32),
        'lin_b': jax.random.normal(subkeys[4 * n + 1], (n,), jnp.float32),
    }


def reference(queries, keys, params, kernel_sizes):
    """Pure-JAX reference matching the PyTorch module."""
    lin_w = params['lin_w'].reshape(-1)
    lin_b = params['lin_b'].reshape(-1)
    logits = queries[..., None] * lin_w + lin_b          # (B,L,C,K)
    mix = jax.nn.softmax(logits, axis=-1)

    def causal_conv(x, w, b, sz):
        B, L, _ = x.shape
        xp = jnp.pad(x, ((0, 0), (sz - 1, 0), (0, 0)))
        out = jnp.zeros((B, L, w.shape[0]), jnp.float32)
        for kk in range(sz):
            out = out + jnp.einsum('blc,oc->blo', xp[:, kk:kk + L, :], w[:, :, kk])
        return out + b

    qs = jnp.stack([causal_conv(queries, params['wq'][j], params['bq'][j], sz)
                    for j, sz in enumerate(kernel_sizes)], axis=-1)
    ks = jnp.stack([causal_conv(keys, params['wk'][j], params['bk'][j], sz)
                    for j, sz in enumerate(kernel_sizes)], axis=-1)
    return jnp.sum(qs * mix, axis=-1), jnp.sum(ks * mix, axis=-1)


if __name__ == "__main__":
    B, L, C = 2, 16, 8
    kernel_sizes = (2, 3, 4)

    key = jax.random.PRNGKey(0)
    kq, kk, kp = jax.random.split(key, 3)
    queries = jax.random.normal(kq, (B, L, C), jnp.float32)
    keys_x = jax.random.normal(kk, (B, L, C), jnp.float32)
    params = init_params(kp, kernel_sizes, C, C)

    out_q, out_k = multi_locality_forward(queries, keys_x, params, kernel_sizes)
    jax.block_until_ready((out_q, out_k))

    ref_q, ref_k = reference(queries, keys_x, params, kernel_sizes)
    assert out_q.shape == (B, L, C) and out_k.shape == (B, L, C)
    assert jnp.allclose(out_q, ref_q, rtol=5e-2, atol=5e-2)
    assert jnp.allclose(out_k, ref_k, rtol=5e-2, atol=5e-2)
    print("KERNEL_OK")
</pallas_src>

<mosaic_0001>
module attributes {stable_mosaic.version = 11 : i64} {
  func.func @_multi_locality_kernel(%arg0: i32, %arg1: i32, %arg2: memref<1x16x8xf32, #tpu.memory_space<vmem>>, %arg3: memref<1x16x8xf32, #tpu.memory_space<vmem>>, %arg4: memref<1x8x8xf32, #tpu.memory_space<vmem>>, %arg5: memref<1x8x8xf32, #tpu.memory_space<vmem>>, %arg6: memref<32x24xbf16, #tpu.memory_space<vmem>>, %arg7: memref<32x24xbf16, #tpu.memory_space<vmem>>, %arg8: memref<1x24xf32, #tpu.memory_space<vmem>>, %arg9: memref<1x24xf32, #tpu.memory_space<vmem>>, %arg10: memref<3x1x8xf32, #tpu.memory_space<vmem>>, %arg11: memref<3x1x8xf32, #tpu.memory_space<vmem>>, %arg12: memref<1x16x8xf32, #tpu.memory_space<vmem>>, %arg13: memref<1x16x8xf32, #tpu.memory_space<vmem>>, %arg14: memref<16x32xf32, #tpu.memory_space<vmem>>, %arg15: memref<16x32xf32, #tpu.memory_space<vmem>>) attributes {dimension_semantics = [#tpu.dimension_semantics<parallel>, #tpu.dimension_semantics<parallel>], iteration_bounds = array<i64: 2, 1>, scalar_prefetch = 0 : i64, scratch_operands = 2 : i64, tpu.core_type = #tpu.core_type<tc>, window_params = [{transform_indices = @transform_0, window_bounds = array<i64: 1, 16, 8>}, {transform_indices = @transform_1, window_bounds = array<i64: 1, 16, 8>}, {transform_indices = @transform_2, window_bounds = array<i64: 1, 8, 8>}, {transform_indices = @transform_3, window_bounds = array<i64: 1, 8, 8>}, {pipeline_mode = #tpu.pipeline_mode<synchronous>, transform_indices = @transform_4, window_bounds = array<i64: 32, 24>}, {pipeline_mode = #tpu.pipeline_mode<synchronous>, transform_indices = @transform_5, window_bounds = array<i64: 32, 24>}, {pipeline_mode = #tpu.pipeline_mode<synchronous>, transform_indices = @transform_6, window_bounds = array<i64: 1, 24>}, {pipeline_mode = #tpu.pipeline_mode<synchronous>, transform_indices = @transform_7, window_bounds = array<i64: 1, 24>}, {pipeline_mode = #tpu.pipeline_mode<synchronous>, transform_indices = @transform_8, window_bounds = array<i64: 3, 1, 8>}, {pipeline_mode = #tpu.pipeline_mode<synchronous>, transform_indices = @transform_9, window_bounds = array<i64: 3, 1, 8>}, {transform_indices = @transform_10, window_bounds = array<i64: 1, 16, 8>}, {transform_indices = @transform_11, window_bounds = array<i64: 1, 16, 8>}]} {
    %c0 = arith.constant 0 : index
    %c0_0 = arith.constant 0 : index
    %c0_1 = arith.constant 0 : index
    %0 = vector.load %arg2[%c0, %c0_0, %c0_1] : memref<1x16x8xf32, #tpu.memory_space<vmem>>, vector<1x16x8xf32>
    %1 = vector.shape_cast %0 : vector<1x16x8xf32> to vector<16x8xf32>
    %c0_2 = arith.constant 0 : index
    %c0_3 = arith.constant 0 : index
    %c0_4 = arith.constant 0 : index
    %2 = vector.load %arg3[%c0_2, %c0_3, %c0_4] : memref<1x16x8xf32, #tpu.memory_space<vmem>>, vector<1x16x8xf32>
    %3 = vector.shape_cast %2 : vector<1x16x8xf32> to vector<16x8xf32>
    %c0_i32 = arith.constant 0 : i32
    %4 = arith.cmpi eq, %arg1, %c0_i32 : i32
    %c0_5 = arith.constant 0 : index
    %c0_6 = arith.constant 0 : index
    %c0_7 = arith.constant 0 : index
    %5 = vector.load %arg4[%c0_5, %c0_6, %c0_7] : memref<1x8x8xf32, #tpu.memory_space<vmem>>, vector<1x8x8xf32>
    %6 = vector.shape_cast %5 : vector<1x8x8xf32> to vector<8x8xf32>
    %cst = arith.constant 0.000000e+00 : f32
    %7 = vector.broadcast %cst : f32 to vector<8x8xf32>
    %8 = arith.select %4, %7, %6 : vector<8x8xf32>
    %c0_8 = arith.constant 0 : index
    %c0_9 = arith.constant 0 : index
    %c0_10 = arith.constant 0 : index
    %9 = vector.load %arg5[%c0_8, %c0_9, %c0_10] : memref<1x8x8xf32, #tpu.memory_space<vmem>>, vector<1x8x8xf32>
    %10 = vector.shape_cast %9 : vector<1x8x8xf32> to vector<8x8xf32>
    %cst_11 = arith.constant 0.000000e+00 : f32
    %11 = vector.broadcast %cst_11 : f32 to vector<8x8xf32>
    %12 = arith.select %4, %11, %10 : vector<8x8xf32>
    %13 = vector.extract_strided_slice %8 {offsets = [5, 0], sizes = [3, 8], strides = [1, 1]} : vector<8x8xf32> to vector<3x8xf32>
    %c0_12 = arith.constant 0 : index
    %c0_13 = arith.constant 0 : index
    %14 = vector.load %arg14[%c0_12, %c0_13] : memref<16x32xf32, #tpu.memory_space<vmem>>, vector<3x8xf32>
    tpu.vector_store %arg14[%c0_12, %c0_13], %13 {strides = array<i32>} : memref<16x32xf32, #tpu.memory_space<vmem>>, vector<3x8xf32>,
    %15 = vector.extract_strided_slice %12 {offsets = [5, 0], sizes = [3, 8], strides = [1, 1]} : vector<8x8xf32> to vector<3x8xf32>
    %c0_14 = arith.constant 0 : index
    %c0_15 = arith.constant 0 : index
    %16 = vector.load %arg15[%c0_14, %c0_15] : memref<16x32xf32, #tpu.memory_space<vmem>>, vector<3x8xf32>
    tpu.vector_store %arg15[%c0_14, %c0_15], %15 {strides = array<i32>} : memref<16x32xf32, #tpu.memory_space<vmem>>, vector<3x8xf32>,
    %17 = vector.extract_strided_slice %1 {offsets = [0, 0], sizes = [13, 8], strides = [1, 1]} : vector<16x8xf32> to vector<13x8xf32>
    %c3 = arith.constant 3 : index
    %c0_16 = arith.constant 0 : index
    %18 = vector.load %arg14[%c3, %c0_16] : memref<16x32xf32, #tpu.memory_space<vmem>>, vector<13x8xf32>
    tpu.vector_store %arg14[%c3, %c0_16], %17 {strides = array<i32>} : memref<16x32xf32, #tpu.memory_space<vmem>>, vector<13x8xf32>,
    %19 = vector.extract_strided_slice %3 {offsets = [0, 0], sizes = [13, 8], strides = [1, 1]} : vector<16x8xf32> to vector<13x8xf32>
    %c3_17 = arith.constant 3 : index
    %c0_18 = arith.constant 0 : index
    %20 = vector.load %arg15[%c3_17, %c0_18] : memref<16x32xf32, #tpu.memory_space<vmem>>, vector<13x8xf32>
    tpu.vector_store %arg15[%c3_17, %c0_18], %19 {strides = array<i32>} : memref<16x32xf32, #tpu.memory_space<vmem>>, vector<13x8xf32>,
    %21 = vector.extract_strided_slice %8 {offsets = [6, 0], sizes = [2, 8], strides = [1, 1]} : vector<8x8xf32> to vector<2x8xf32>
    %c0_19 = arith.constant 0 : index
    %c8 = arith.constant 8 : index
    %22 = vector.load %arg14[%c0_19, %c8] : memref<16x32xf32, #tpu.memory_space<vmem>>, vector<2x8xf32>
    tpu.vector_store %arg14[%c0_19, %c8], %21 {strides = array<i32>} : memref<16x32xf32, #tpu.memory_space<vmem>>, vector<2x8xf32>,
    %23 = vector.extract_strided_slice %12 {offsets = [6, 0], sizes = [2, 8], strides = [1, 1]} : vector<8x8xf32> to vector<2x8xf32>
    %c0_20 = arith.constant 0 : index
    %c8_21 = arith.constant 8 : index
    %24 = vector.load %arg15[%c0_20, %c8_21] : memref<16x32xf32, #tpu.memory_space<vmem>>, vector<2x8xf32>
    tpu.vector_store %arg15[%c0_20, %c8_21], %23 {strides = array<i32>} : memref<16x32xf32, #tpu.memory_space<vmem>>, vector<2x8xf32>,
    %25 = vector.extract_strided_slice %1 {offsets = [0, 0], sizes = [14, 8], strides = [1, 1]} : vector<16x8xf32> to vector<14x8xf32>
    %c2 = arith.constant 2 : index
    %c8_22 = arith.constant 8 : index
    %26 = vector.load %arg14[%c2, %c8_22] : memref<16x32xf32, #tpu.memory_space<vmem>>, vector<14x8xf32>
    tpu.vector_store %arg14[%c2, %c8_22], %25 {strides = array<i32>} : memref<16x32xf32, #tpu.memory_space<vmem>>, vector<14x8xf32>,
    %27 = vector.extract_strided_slice %3 {offsets = [0, 0], sizes = [14, 8], strides = [1, 1]} : vector<16x8xf32> to vector<14x8xf32>
    %c2_23 = arith.constant 2 : index
    %c8_24 = arith.constant 8 : index
    %28 = vector.load %arg15[%c2_23, %c8_24] : memref<16x32xf32, #tpu.memory_space<vmem>>, vector<14x8xf32>
    tpu.vector_store %arg15[%c2_23, %c8_24], %27 {strides = array<i32>} : memref<16x32xf32, #tpu.memory_space<vmem>>, vector<14x8xf32>,
    %29 = vector.extract_strided_slice %8 {offsets = [7, 0], sizes = [1, 8], strides = [1, 1]} : vector<8x8xf32> to vector<1x8xf32>
    %c0_25 = arith.constant 0 : index
    %c16 = arith.constant 16 : index
    %30 = vector.load %arg14[%c0_25, %c16] : memref<16x32xf32, #tpu.memory_space<vmem>>, vector<1x8xf32>
    tpu.vector_store %arg14[%c0_25, %c16], %29 {strides = array<i32>} : memref<16x32xf32, #tpu.memory_space<vmem>>, vector<1x8xf32>,
    %31 = vector.extract_strided_slice %12 {offsets = [7, 0], sizes = [1, 8], strides = [1, 1]} : vector<8x8xf32> to vector<1x8xf32>
    %c0_26 = arith.constant 0 : index
    %c16_27 = arith.constant 16 : index
    %32 = vector.load %arg15[%c0_26, %c16_27] : memref<16x32xf32, #tpu.memory_space<vmem>>, vector<1x8xf32>
    tpu.vector_store %arg15[%c0_26, %c16_27], %31 {strides = array<i32>} : memref<16x32xf32, #tpu.memory_space<vmem>>, vector<1x8xf32>,
    %33 = vector.extract_strided_slice %1 {offsets = [0, 0], sizes = [15, 8], strides = [1, 1]} : vector<16x8xf32> to vector<15x8xf32>
    %c1 = arith.constant 1 : index
    %c16_28 = arith.constant 16 : index
    %34 = vector.load %arg14[%c1, %c16_28] : memref<16x32xf32, #tpu.memory_space<vmem>>, vector<15x8xf32>
    tpu.vector_store %arg14[%c1, %c16_28], %33 {strides = array<i32>} : memref<16x32xf32, #tpu.memory_space<vmem>>, vector<15x8xf32>,
    %35 = vector.extract_strided_slice %3 {offsets = [0, 0], sizes = [15, 8], strides = [1, 1]} : vector<16x8xf32> to vector<15x8xf32>
    %c1_29 = arith.constant 1 : index
    %c16_30 = arith.constant 16 : index
    %36 = vector.load %arg15[%c1_29, %c16_30] : memref<16x32xf32, #tpu.memory_space<vmem>>, vector<15x8xf32>
    tpu.vector_store %arg15[%c1_29, %c16_30], %35 {strides = array<i32>} : memref<16x32xf32, #tpu.memory_space<vmem>>, vector<15x8xf32>,
    %c0_31 = arith.constant 0 : index
    %c24 = arith.constant 24 : index
    %37 = vector.load %arg14[%c0_31, %c24] : memref<16x32xf32, #tpu.memory_space<vmem>>, vector<16x8xf32>
    tpu.vector_store %arg14[%c0_31, %c24], %1 {strides = array<i32>} : memref<16x32xf32, #tpu.memory_space<vmem>>, vector<16x8xf32>,
    %c0_32 = arith.constant 0 : index
    %c24_33 = arith.constant 24 : index
    %38 = vector.load %arg15[%c0_32, %c24_33] : memref<16x32xf32, #tpu.memory_space<vmem>>, vector<16x8xf32>
    tpu.vector_store %arg15[%c0_32, %c24_33], %3 {strides = array<i32>} : memref<16x32xf32, #tpu.memory_space<vmem>>, vector<16x8xf32>,
    %c0_34 = arith.constant 0 : index
    %c0_35 = arith.constant 0 : index
    %39 = vector.load %arg14[%c0_34, %c0_35] : memref<16x32xf32, #tpu.memory_space<vmem>>, vector<16x32xf32>
    %40 = arith.truncf %39 : vector<16x32xf32> to vector<16x32xbf16>
    %c0_36 = arith.constant 0 : index
    %c0_37 = arith.constant 0 : index
    %41 = vector.load %arg6[%c0_36, %c0_37] : memref<32x24xbf16, #tpu.memory_space<vmem>>, vector<32x24xbf16>
    %cst_38 = arith.constant dense<0.000000e+00> : vector<16x24xf32>
    %42 = tpu.matmul %40, %41, %cst_38 {dimension_numbers = #tpu.dot_dimension_numbers<[1], [0], [0], [1], [0, 0, 1, 1], [], []>} : vector<16x32xbf16>, vector<32x24xbf16>, vector<16x24xf32> -> vector<16x24xf32>
    %c0_39 = arith.constant 0 : index
    %c0_40 = arith.constant 0 : index
    %43 = vector.load %arg8[%c0_39, %c0_40] : memref<1x24xf32, #tpu.memory_space<vmem>>, vector<1x24xf32>
    %44 = vector.broadcast %43 : vector<1x24xf32> to vector<16x24xf32>
    %45 = arith.addf %42, %44 : vector<16x24xf32>
    %c0_41 = arith.constant 0 : index
    %c0_42 = arith.constant 0 : index
    %46 = vector.load %arg15[%c0_41, %c0_42] : memref<16x32xf32, #tpu.memory_space<vmem>>, vector<16x32xf32>
    %47 = arith.truncf %46 : vector<16x32xf32> to vector<16x32xbf16>
    %c0_43 = arith.constant 0 : index
    %c0_44 = arith.constant 0 : index
    %48 = vector.load %arg7[%c0_43, %c0_44] : memref<32x24xbf16, #tpu.memory_space<vmem>>, vector<32x24xbf16>
    %cst_45 = arith.constant dense<0.000000e+00> : vector<16x24xf32>
    %49 = tpu.matmul %47, %48, %cst_45 {dimension_numbers = #tpu.dot_dimension_numbers<[1], [0], [0], [1], [0, 0, 1, 1], [], []>} : vector<16x32xbf16>, vector<32x24xbf16>, vector<16x24xf32> -> vector<16x24xf32>
    %c0_46 = arith.constant 0 : index
    %c0_47 = arith.constant 0 : index
    %50 = vector.load %arg9[%c0_46, %c0_47] : memref<1x24xf32, #tpu.memory_space<vmem>>, vector<1x24xf32>
    %51 = vector.broadcast %50 : vector<1x24xf32> to vector<16x24xf32>
    %52 = arith.addf %49, %51 : vector<16x24xf32>
    %c0_48 = arith.constant 0 : index
    %c0_49 = arith.constant 0 : index
    %c0_50 = arith.constant 0 : index
    %53 = vector.load %arg10[%c0_48, %c0_49, %c0_50] : memref<3x1x8xf32, #tpu.memory_space<vmem>>, vector<1x1x8xf32>
    %54 = vector.shape_cast %53 : vector<1x1x8xf32> to vector<1x8xf32>
    %55 = vector.broadcast %54 : vector<1x8xf32> to vector<16x8xf32>
    %56 = arith.mulf %1, %55 : vector<16x8xf32>
    %c0_51 = arith.constant 0 : index
    %c0_52 = arith.constant 0 : index
    %c0_53 = arith.constant 0 : index
    %57 = vector.load %arg11[%c0_51, %c0_52, %c0_53] : memref<3x1x8xf32, #tpu.memory_space<vmem>>, vector<1x1x8xf32>
    %58 = vector.shape_cast %57 : vector<1x1x8xf32> to vector<1x8xf32>
    %59 = vector.broadcast %58 : vector<1x8xf32> to vector<16x8xf32>
    %60 = arith.addf %56, %59 : vector<16x8xf32>
    %c1_54 = arith.constant 1 : index
    %c0_55 = arith.constant 0 : index
    %c0_56 = arith.constant 0 : index
    %61 = vector.load %arg10[%c1_54, %c0_55, %c0_56] : memref<3x1x8xf32, #tpu.memory_space<vmem>>, vector<1x1x8xf32>
    %62 = vector.shape_cast %61 : vector<1x1x8xf32> to vector<1x8xf32>
    %63 = vector.broadcast %62 : vector<1x8xf32> to vector<16x8xf32>
    %64 = arith.mulf %1, %63 : vector<16x8xf32>
    %c1_57 = arith.constant 1 : index
    %c0_58 = arith.constant 0 : index
    %c0_59 = arith.constant 0 : index
    %65 = vector.load %arg11[%c1_57, %c0_58, %c0_59] : memref<3x1x8xf32, #tpu.memory_space<vmem>>, vector<1x1x8xf32>
    %66 = vector.shape_cast %65 : vector<1x1x8xf32> to vector<1x8xf32>
    %67 = vector.broadcast %66 : vector<1x8xf32> to vector<16x8xf32>
    %68 = arith.addf %64, %67 : vector<16x8xf32>
    %c2_60 = arith.constant 2 : index
    %c0_61 = arith.constant 0 : index
    %c0_62 = arith.constant 0 : index
    %69 = vector.load %arg10[%c2_60, %c0_61, %c0_62] : memref<3x1x8xf32, #tpu.memory_space<vmem>>, vector<1x1x8xf32>
    %70 = vector.shape_cast %69 : vector<1x1x8xf32> to vector<1x8xf32>
    %71 = vector.broadcast %70 : vector<1x8xf32> to vector<16x8xf32>
    %72 = arith.mulf %1, %71 : vector<16x8xf32>
    %c2_63 = arith.constant 2 : index
    %c0_64 = arith.constant 0 : index
    %c0_65 = arith.constant 0 : index
    %73 = vector.load %arg11[%c2_63, %c0_64, %c0_65] : memref<3x1x8xf32, #tpu.memory_space<vmem>>, vector<1x1x8xf32>
    %74 = vector.shape_cast %73 : vector<1x1x8xf32> to vector<1x8xf32>
    %75 = vector.broadcast %74 : vector<1x8xf32> to vector<16x8xf32>
    %76 = arith.addf %72, %75 : vector<16x8xf32>
    %77 = arith.maximumf %60, %68 : vector<16x8xf32>
    %78 = arith.maximumf %77, %76 : vector<16x8xf32>
    %cst_66 = arith.constant 0.000000e+00 : f32
    %79 = vector.broadcast %cst_66 : f32 to vector<16x8xf32>
    %cst_67 = arith.constant 0.000000e+00 : f32
    %80 = vector.broadcast %cst_67 : f32 to vector<16x8xf32>
    %cst_68 = arith.constant 0.000000e+00 : f32
    %81 = vector.broadcast %cst_68 : f32 to vector<16x8xf32>
    %82 = arith.subf %60, %78 : vector<16x8xf32>
    %83 = math.exp %82 : vector<16x8xf32>
    %84 = arith.addf %79, %83 : vector<16x8xf32>
    %85 = vector.extract_strided_slice %45 {offsets = [0, 0], sizes = [16, 8], strides = [1, 1]} : vector<16x24xf32> to vector<16x8xf32>
    %86 = arith.mulf %83, %85 : vector<16x8xf32>
    %87 = arith.addf %80, %86 : vector<16x8xf32>
    %88 = vector.extract_strided_slice %52 {offsets = [0, 0], sizes = [16, 8], strides = [1, 1]} : vector<16x24xf32> to vector<16x8xf32>
    %89 = arith.mulf %83, %88 : vector<16x8xf32>
    %90 = arith.addf %81, %89 : vector<16x8xf32>
    %91 = arith.subf %68, %78 : vector<16x8xf32>
    %92 = math.exp %91 : vector<16x8xf32>
    %93 = arith.addf %84, %92 : vector<16x8xf32>
    %94 = vector.extract_strided_slice %45 {offsets = [0, 8], sizes = [16, 8], strides = [1, 1]} : vector<16x24xf32> to vector<16x8xf32>
    %95 = arith.mulf %92, %94 : vector<16x8xf32>
    %96 = arith.addf %87, %95 : vector<16x8xf32>
    %97 = vector.extract_strided_slice %52 {offsets = [0, 8], sizes = [16, 8], strides = [1, 1]} : vector<16x24xf32> to vector<16x8xf32>
    %98 = arith.mulf %92, %97 : vector<16x8xf32>
    %99 = arith.addf %90, %98 : vector<16x8xf32>
    %100 = arith.subf %76, %78 : vector<16x8xf32>
    %101 = math.exp %100 : vector<16x8xf32>
    %102 = arith.addf %93, %101 : vector<16x8xf32>
    %103 = vector.extract_strided_slice %45 {offsets = [0, 16], sizes = [16, 8], strides = [1, 1]} : vector<16x24xf32> to vector<16x8xf32>
    %104 = arith.mulf %101, %103 : vector<16x8xf32>
    %105 = arith.addf %96, %104 : vector<16x8xf32>
    %106 = vector.extract_strided_slice %52 {offsets = [0, 16], sizes = [16, 8], strides = [1, 1]} : vector<16x24xf32> to vector<16x8xf32>
    %107 = arith.mulf %101, %106 : vector<16x8xf32>
    %108 = arith.addf %99, %107 : vector<16x8xf32>
    %109 = tpu.reciprocal %102 {approx = true} : vector<16x8xf32> -> vector<16x8xf32>
    %110 = arith.mulf %105, %109 : vector<16x8xf32>
    %c0_69 = arith.constant 0 : index
    %c0_70 = arith.constant 0 : index
    %c0_71 = arith.constant 0 : index
    %111 = vector.load %arg12[%c0_69, %c0_70, %c0_71] : memref<1x16x8xf32, #tpu.memory_space<vmem>>, vector<1x16x8xf32>
    %112 = vector.shape_cast %111 : vector<1x16x8xf32> to vector<16x8xf32>
    %113 = vector.shape_cast %110 : vector<16x8xf32> to vector<1x16x8xf32>
    tpu.vector_store %arg12[%c0_69, %c0_70, %c0_71], %113 {strides = array<i32>} : memref<1x16x8xf32, #tpu.memory_space<vmem>>, vector<1x16x8xf32>,
    %114 = arith.mulf %108, %109 : vector<16x8xf32>
    %c0_72 = arith.constant 0 : index
    %c0_73 = arith.constant 0 : index
    %c0_74 = arith.constant 0 : index
    %115 = vector.load %arg13[%c0_72, %c0_73, %c0_74] : memref<1x16x8xf32, #tpu.memory_space<vmem>>, vector<1x16x8xf32>
    %116 = vector.shape_cast %115 : vector<1x16x8xf32> to vector<16x8xf32>
    %117 = vector.shape_cast %114 : vector<16x8xf32> to vector<1x16x8xf32>
    tpu.vector_store %arg13[%c0_72, %c0_73, %c0_74], %117 {strides = array<i32>} : memref<1x16x8xf32, #tpu.memory_space<vmem>>, vector<1x16x8xf32>,
    return
  }
  func.func @transform_0(%arg0: i32, %arg1: i32) -> (i32, i32, i32) {
    %c0_i32 = arith.constant 0 : i32
    %c0_i32_0 = arith.constant 0 : i32
    return %arg0, %arg1, %c0_i32 : i32, i32, i32
  }
  func.func @transform_1(%arg0: i32, %arg1: i32) -> (i32, i32, i32) {
    %c0_i32 = arith.constant 0 : i32
    %c0_i32_0 = arith.constant 0 : i32
    return %arg0, %arg1, %c0_i32 : i32, i32, i32
  }
  func.func @transform_2(%arg0: i32, %arg1: i32) -> (i32, i32, i32) {
    %c2_i32 = arith.constant 2 : i32
    %0 = arith.muli %arg1, %c2_i32 : i32
    %c1_i32 = arith.constant 1 : i32
    %1 = arith.subi %0, %c1_i32 : i32
    %c0_i32 = arith.constant 0 : i32
    %2 = arith.maxsi %1, %c0_i32 : i32
    %c0_i32_0 = arith.constant 0 : i32
    %c0_i32_1 = arith.constant 0 : i32
    return %arg0, %2, %c0_i32_0 : i32, i32, i32
  }
  func.func @transform_3(%arg0: i32, %arg1: i32) -> (i32, i32, i32) {
    %c2_i32 = arith.constant 2 : i32
    %0 = arith.muli %arg1, %c2_i32 : i32
    %c1_i32 = arith.constant 1 : i32
    %1 = arith.subi %0, %c1_i32 : i32
    %c0_i32 = arith.constant 0 : i32
    %2 = arith.maxsi %1, %c0_i32 : i32
    %c0_i32_0 = arith.constant 0 : i32
    %c0_i32_1 = arith.constant 0 : i32
    return %arg0, %2, %c0_i32_0 : i32, i32, i32
  }
  func.func @transform_4(%arg0: i32, %arg1: i32) -> (i32, i32) {
    %c0_i32 = arith.constant 0 : i32
    %c0_i32_0 = arith.constant 0 : i32
    %c0_i32_1 = arith.constant 0 : i32
    return %c0_i32, %c0_i32_0 : i32, i32
  }
  func.func @transform_5(%arg0: i32, %arg1: i32) -> (i32, i32) {
    %c0_i32 = arith.constant 0 : i32
    %c0_i32_0 = arith.constant 0 : i32
    %c0_i32_1 = arith.constant 0 : i32
    return %c0_i32, %c0_i32_0 : i32, i32
  }
  func.func @transform_6(%arg0: i32, %arg1: i32) -> (i32, i32) {
    %c0_i32 = arith.constant 0 : i32
    %c0_i32_0 = arith.constant 0 : i32
    %c0_i32_1 = arith.constant 0 : i32
    return %c0_i32, %c0_i32_0 : i32, i32
  }
  func.func @transform_7(%arg0: i32, %arg1: i32) -> (i32, i32) {
    %c0_i32 = arith.constant 0 : i32
    %c0_i32_0 = arith.constant 0 : i32
    %c0_i32_1 = arith.constant 0 : i32
    return %c0_i32, %c0_i32_0 : i32, i32
  }
  func.func @transform_8(%arg0: i32, %arg1: i32) -> (i32, i32, i32) {
    %c0_i32 = arith.constant 0 : i32
    %c0_i32_0 = arith.constant 0 : i32
    %c0_i32_1 = arith.constant 0 : i32
    %c0_i32_2 = arith.constant 0 : i32
    return %c0_i32, %c0_i32_0, %c0_i32_1 : i32, i32, i32
  }
  func.func @transform_9(%arg0: i32, %arg1: i32) -> (i32, i32, i32) {
    %c0_i32 = arith.constant 0 : i32
    %c0_i32_0 = arith.constant 0 : i32
    %c0_i32_1 = arith.constant 0 : i32
    %c0_i32_2 = arith.constant 0 : i32
    return %c0_i32, %c0_i32_0, %c0_i32_1 : i32, i32, i32
  }
  func.func @transform_10(%arg0: i32, %arg1: i32) -> (i32, i32, i32) {
    %c0_i32 = arith.constant 0 : i32
    %c0_i32_0 = arith.constant 0 : i32
    return %arg0, %arg1, %c0_i32 : i32, i32, i32
  }
  func.func @transform_11(%arg0: i32, %arg1: i32) -> (i32, i32, i32) {
    %c0_i32 = arith.constant 0 : i32
    %c0_i32_0 = arith.constant 0 : i32
    return %arg0, %arg1, %c0_i32 : i32, i32, i32
  }
}

</mosaic_0001>

<llo_original>
// kernel: tpu_custom_call.1
$region0: #{tpu_custom_call.1}
  #allocation0 [shape = 'u32[]', space=smem, size = 0x4, offset = 0x4, fixed_abs, tag = 'smem constant byte address 0x4 - core index']
  #allocation1 [shape = 'u32[144,128]{1,0:T(1,128)}', space=vmem, size = 0x12000, scoped, tag = 'internal scratch']
  #allocation2 [shape = 'f32[16,32]{1,0:T(8,128)}', space=vmem, size = 0x2000, scoped, tag = 'scratch operand']
  #allocation3 [shape = 'f32[16,32]{1,0:T(8,128)}', space=vmem, size = 0x2000, scoped, tag = 'scratch operand']
  %s0 = inlined_call_operand.vmem [shape: f32[2,16,8], index: 0, kind: input, shape index: {}]
  %s1 = inlined_call_operand.vmem [shape: f32[2,16,8], index: 1, kind: input, shape index: {}]
  %s2 = inlined_call_operand.vmem [shape: f32[2,16,8], index: 2, kind: input, shape index: {}]
  %s3 = inlined_call_operand.vmem [shape: f32[2,16,8], index: 3, kind: input, shape index: {}]
  %s4 = inlined_call_operand.vmem [shape: bf16[32,24], index: 4, kind: input, shape index: {}]
  %s5 = inlined_call_operand.vmem [shape: bf16[32,24], index: 5, kind: input, shape index: {}]
  %s6 = inlined_call_operand.vmem [shape: f32[1,24], index: 6, kind: input, shape index: {}]
  %s7 = inlined_call_operand.vmem [shape: f32[1,24], index: 7, kind: input, shape index: {}]
  %s8 = inlined_call_operand.vmem [shape: f32[3,1,8], index: 8, kind: input, shape index: {}]
  %s9 = inlined_call_operand.vmem [shape: f32[3,1,8], index: 9, kind: input, shape index: {}]
  %s10 = inlined_call_operand.vmem [shape: f32[2,16,8], index: 10, kind: output, shape index: {0}]
  %s11 = inlined_call_operand.vmem [shape: f32[2,16,8], index: 11, kind: output, shape index: {1}]
  %12 = xla_tuple %s10, %s11
  %s13 = sld [smem:[#allocation0]]
  $region81: #{tpu_custom_call.1} parent=0
    _
  %s15 = ssub.s32 1, %s13
  %s16 = scalar_select 0, %s15, %s13
  loop: start=0, step=1, limit=4
  $region2: #{tpu_custom_call.1} parent=0 // loop_pre_header
    _
  $region3: #{tpu_custom_call.1} parent=0 // loop_header
    %s18 = sphi 0, %s22
    %p19 = scmp.ge.s32.totalorder %s18, 4
    %s25 = sphi 0, %s37
    %s26 = sphi 0, %s33
    %s27 = sphi 0, %s25
    %s28 = sphi 0, %s26
    %s29 = sphi 0, %s27
    %s30 = sphi 0, %s28
    %s42 = sphi 0, %s44
    %s45 = sphi 0, %s42
    %s46 = sphi 0, %s45
    %s62 = sphi 0, %s46
    %s70 = sphi 0, %s72
    %s73 = sphi 0, %s70
    %s74 = sphi 0, %s73
    %s90 = sphi 0, %s74
    %s106 = sphi 0, %s108
    %s109 = sphi 0, %s106
    %s110 = sphi 0, %s109
    %s126 = sphi 0, %s110
    %s142 = sphi 0, %s144
    %s145 = sphi 0, %s142
    %s146 = sphi 0, %s145
    %s162 = sphi 0, %s146
    %s166 = sphi 0, %s166
    %s168 = sphi 0, %s166
    %s169 = sphi 0, %s168
    %s183 = sphi 0, %s169
    %s187 = sphi 0, %s187
    %s189 = sphi 0, %s187
    %s190 = sphi 0, %s189
    %s204 = sphi 0, %s190
    %s208 = sphi 0, %s208
    %s210 = sphi 0, %s208
    %s211 = sphi 0, %s210
    %s225 = sphi 0, %s211
    %s229 = sphi 0, %s229
    %s231 = sphi 0, %s229
    %s232 = sphi 0, %s231
    %s246 = sphi 0, %s232
    %s250 = sphi 0, %s250
    %s252 = sphi 0, %s250
    %s253 = sphi 0, %s252
    %s267 = sphi 0, %s253
    %s271 = sphi 0, %s271
    %s273 = sphi 0, %s271
    %s274 = sphi 0, %s273
    %s288 = sphi 0, %s274
    %s296 = sphi 0, %s298
    %s299 = sphi 0, %s296
    %s300 = sphi 0, %s299
    %s316 = sphi 0, %s300
    %s324 = sphi 0, %s326
    %s327 = sphi 0, %s324
    %s328 = sphi 0, %s327
    %s344 = sphi 0, %s328
  $region4: #{tpu_custom_call.1} parent=0 // loop_header_branch
    %21 = sbr.rel (%p19) target = $region8
  $region5: #{tpu_custom_call.1} parent=0 // loop_body
    %s23 = ssub.s32 %s18, 1
    %s24 = ssub.s32 %s18, 2
    %s31 = sadd.s32 1, %s26
    %p32 = scmp.ge.s32.totalorder %s31, 1
    %s33 = scalar_select %p32, 0, %s31
    %s34 = sadd.s32 1, %s25
    %s35 = scalar_select %p32, %s34, %s25
    %p36 = scmp.ge.s32.totalorder %s35, 2
    %s37 = scalar_select %p36, 0, %s35
    %s38 = ssub.s32 %s25, %s37
    %s39 = ssub.s32 %s26, %s33
    %s40 = sor.u32 %s38, %s39
    %p41 = scmp.eq.s32.totalorder %s40, 0
    %s43 = sadd.s32 %s42, 1
    %s44 = scalar_select %p41, %s42, %s43
    %p47 = pneg %p41
    %p48 = scmp.eq.s32.totalorder %s18, 1
    %p49 = por %p47, %p48
    %p50 = scmp.ne.s32.totalorder %s42, %s45
    %p51 = scmp.eq.s32.totalorder %s18, 0
    %p52 = por %p50, %p51
    %p53 = scmp.ne.s32.totalorder %s42, %s45
    %p54 = scmp.eq.s32.totalorder %s23, 1
    %p55 = por %p53, %p54
    %p56 = scmp.ne.s32.totalorder %s45, %s46
    %p57 = scmp.eq.s32.totalorder %s23, 0
    %p58 = por %p56, %p57
    %p59 = scmp.ne.s32.totalorder %s45, %s46
    %p60 = scmp.eq.s32.totalorder %s24, 1
    %p61 = por %p59, %p60
    %p63 = scmp.ne.s32.totalorder %s46, %s62
    %p64 = scmp.eq.s32.totalorder %s24, 0
    %p65 = por %p63, %p64
    %s66 = ssub.s32 %s25, %s37
    %s67 = ssub.s32 %s26, %s33
    %s68 = sor.u32 %s66, %s67
    %p69 = scmp.eq.s32.totalorder %s68, 0
    %s71 = sadd.s32 %s70, 1
    %s72 = scalar_select %p69, %s70, %s71
    %p75 = pneg %p69
    %p76 = scmp.eq.s32.totalorder %s18, 1
    %p77 = por %p75, %p76
    %p78 = scmp.ne.s32.totalorder %s70, %s73
    %p79 = scmp.eq.s32.totalorder %s18, 0
    %p80 = por %p78, %p79
    %p81 = scmp.ne.s32.totalorder %s70, %s73
    %p82 = scmp.eq.s32.totalorder %s23, 1
    %p83 = por %p81, %p82
    %p84 = scmp.ne.s32.totalorder %s73, %s74
    %p85 = scmp.eq.s32.totalorder %s23, 0
    %p86 = por %p84, %p85
    %p87 = scmp.ne.s32.totalorder %s73, %s74
    %p88 = scmp.eq.s32.totalorder %s24, 1
    %p89 = por %p87, %p88
    %p91 = scmp.ne.s32.totalorder %s74, %s90
    %p92 = scmp.eq.s32.totalorder %s24, 0
    %p93 = por %p91, %p92
    %s94 = smul.u32 %s26, 2
    %s95 = ssub.s32 %s94, 1
    %p96 = scmp.gt.s32.totalorder %s95, 0
    %s97 = scalar_select %p96, %s95, 0
    %s98 = smul.u32 %s33, 2
    %s99 = ssub.s32 %s98, 1
    %p100 = scmp.gt.s32.totalorder %s99, 0
    %s101 = scalar_select %p100, %s99, 0
    %s102 = ssub.s32 %s25, %s37
    %s103 = ssub.s32 %s97, %s101
    %s104 = sor.u32 %s102, %s103
    %p105 = scmp.eq.s32.totalorder %s104, 0
    %s107 = sadd.s32 %s106, 1
    %s108 = scalar_select %p105, %s106, %s107
    %p111 = pneg %p105
    %p112 = scmp.eq.s32.totalorder %s18, 1
    %p113 = por %p111, %p112
    %p114 = scmp.ne.s32.totalorder %s106, %s109
    %p115 = scmp.eq.s32.totalorder %s18, 0
    %p116 = por %p114, %p115
    %p117 = scmp.ne.s32.totalorder %s106, %s109
    %p118 = scmp.eq.s32.totalorder %s23, 1
    %p119 = por %p117, %p118
    %p120 = scmp.ne.s32.totalorder %s109, %s110
    %p121 = scmp.eq.s32.totalorder %s23, 0
    %p122 = por %p120, %p121
    %p123 = scmp.ne.s32.totalorder %s109, %s110
    %p124 = scmp.eq.s32.totalorder %s24, 1
    %p125 = por %p123, %p124
    %p127 = scmp.ne.s32.totalorder %s110, %s126
    %p128 = scmp.eq.s32.totalorder %s24, 0
    %p129 = por %p127, %p128
    %s130 = smul.u32 %s26, 2
    %s131 = ssub.s32 %s130, 1
    %p132 = scmp.gt.s32.totalorder %s131, 0
    %s133 = scalar_select %p132, %s131, 0
    %s134 = smul.u32 %s33, 2
    %s135 = ssub.s32 %s134, 1
    %p136 = scmp.gt.s32.totalorder %s135, 0
    %s137 = scalar_select %p136, %s135, 0
    %s138 = ssub.s32 %s25, %s37
    %s139 = ssub.s32 %s133, %s137
    %s140 = sor.u32 %s138, %s139
    %p141 = scmp.eq.s32.totalorder %s140, 0
    %s143 = sadd.s32 %s142, 1
    %s144 = scalar_select %p141, %s142, %s143
    %p147 = pneg %p141
    %p148 = scmp.eq.s32.totalorder %s18, 1
    %p149 = por %p147, %p148
    %p150 = scmp.ne.s32.totalorder %s142, %s145
    %p151 = scmp.eq.s32.totalorder %s18, 0
    %p152 = por %p150, %p151
    %p153 = scmp.ne.s32.totalorder %s142, %s145
    %p154 = scmp.eq.s32.totalorder %s23, 1
    %p155 = por %p153, %p154
    %p156 = scmp.ne.s32.totalorder %s145, %s146
    %p157 = scmp.eq.s32.totalorder %s23, 0
    %p158 = por %p156, %p157
    %p159 = scmp.ne.s32.totalorder %s145, %s146
    %p160 = scmp.eq.s32.totalorder %s24, 1
    %p161 = por %p159, %p160
    %p163 = scmp.ne.s32.totalorder %s146, %s162
    %p164 = scmp.eq.s32.totalorder %s24, 0
    %p165 = por %p163, %p164
    %s167 = sadd.s32 %s166, 1
    %p170 = scmp.eq.s32.totalorder %s18, 1
    %p171 = scmp.ne.s32.totalorder %s166, %s168
    %p172 = scmp.eq.s32.totalorder %s18, 0
    %p173 = por %p171, %p172
    %p174 = scmp.ne.s32.totalorder %s166, %s168
    %p175 = scmp.eq.s32.totalorder %s23, 1
    %p176 = por %p174, %p175
    %p177 = scmp.ne.s32.totalorder %s168, %s169
    %p178 = scmp.eq.s32.totalorder %s23, 0
    %p179 = por %p177, %p178
    %p180 = scmp.ne.s32.totalorder %s168, %s169
    %p181 = scmp.eq.s32.totalorder %s24, 1
    %p182 = por %p180, %p181
    %p184 = scmp.ne.s32.totalorder %s169, %s183
    %p185 = scmp.eq.s32.totalorder %s24, 0
    %p186 = por %p184, %p185
    %s188 = sadd.s32 %s187, 1
    %p191 = scmp.eq.s32.totalorder %s18, 1
    %p192 = scmp.ne.s32.totalorder %s187, %s189
    %p193 = scmp.eq.s32.totalorder %s18, 0
    %p194 = por %p192, %p193
    %p195 = scmp.ne.s32.totalorder %s187, %s189
    %p196 = scmp.eq.s32.totalorder %s23, 1
    %p197 = por %p195, %p196
    %p198 = scmp.ne.s32.totalorder %s189, %s190
    %p199 = scmp.eq.s32.totalorder %s23, 0
    %p200 = por %p198, %p199
    %p201 = scmp.ne.s32.totalorder %s189, %s190
    %p202 = scmp.eq.s32.totalorder %s24, 1
    %p203 = por %p201, %p202
    %p205 = scmp.ne.s32.totalorder %s190, %s204
    %p206 = scmp.eq.s32.totalorder %s24, 0
    %p207 = por %p205, %p206
    %s209 = sadd.s32 %s208, 1
    %p212 = scmp.eq.s32.totalorder %s18, 1
    %p213 = scmp.ne.s32.totalorder %s208, %s210
    %p214 = scmp.eq.s32.totalorder %s18, 0
    %p215 = por %p213, %p214
    %p216 = scmp.ne.s32.totalorder %s208, %s210
    %p217 = scmp.eq.s32.totalorder %s23, 1
    %p218 = por %p216, %p217
    %p219 = scmp.ne.s32.totalorder %s210, %s211
    %p220 = scmp.eq.s32.totalorder %s23, 0
    %p221 = por %p219, %p220
    %p222 = scmp.ne.s32.totalorder %s210, %s211
    %p223 = scmp.eq.s32.totalorder %s24, 1
    %p224 = por %p222, %p223
    %p226 = scmp.ne.s32.totalorder %s211, %s225
    %p227 = scmp.eq.s32.totalorder %s24, 0
    %p228 = por %p226, %p227
    %s230 = sadd.s32 %s229, 1
    %p233 = scmp.eq.s32.totalorder %s18, 1
    %p234 = scmp.ne.s32.totalorder %s229, %s231
    %p235 = scmp.eq.s32.totalorder %s18, 0
    %p236 = por %p234, %p235
    %p237 = scmp.ne.s32.totalorder %s229, %s231
    %p238 = scmp.eq.s32.totalorder %s23, 1
    %p239 = por %p237, %p238
    %p240 = scmp.ne.s32.totalorder %s231, %s232
    %p241 = scmp.eq.s32.totalorder %s23, 0
    %p242 = por %p240, %p241
    %p243 = scmp.ne.s32.totalorder %s231, %s232
    %p244 = scmp.eq.s32.totalorder %s24, 1
    %p245 = por %p243, %p244
    %p247 = scmp.ne.s32.totalorder %s232, %s246
    %p248 = scmp.eq.s32.totalorder %s24, 0
    %p249 = por %p247, %p248
    %s251 = sadd.s32 %s250, 1
    %p254 = scmp.eq.s32.totalorder %s18, 1
    %p255 = scmp.ne.s32.totalorder %s250, %s252
    %p256 = scmp.eq.s32.totalorder %s18, 0
    %p257 = por %p255, %p256
    %p258 = scmp.ne.s32.totalorder %s250, %s252
    %p259 = scmp.eq.s32.totalorder %s23, 1
    %p260 = por %p258, %p259
    %p261 = scmp.ne.s32.totalorder %s252, %s253
    %p262 = scmp.eq.s32.totalorder %s23, 0
    %p263 = por %p261, %p262
    %p264 = scmp.ne.s32.totalorder %s252, %s253
    %p265 = scmp.eq.s32.totalorder %s24, 1
    %p266 = por %p264, %p265
    %p268 = scmp.ne.s32.totalorder %s253, %s267
    %p269 = scmp.eq.s32.totalorder %s24, 0
    %p270 = por %p268, %p269
    %s272 = sadd.s32 %s271, 1
    %p275 = scmp.eq.s32.totalorder %s18, 1
    %p276 = scmp.ne.s32.totalorder %s271, %s273
    %p277 = scmp.eq.s32.totalorder %s18, 0
    %p278 = por %p276, %p277
    %p279 = scmp.ne.s32.totalorder %s271, %s273
    %p280 = scmp.eq.s32.totalorder %s23, 1
    %p281 = por %p279, %p280
    %p282 = scmp.ne.s32.totalorder %s273, %s274
    %p283 = scmp.eq.s32.totalorder %s23, 0
    %p284 = por %p282, %p283
    %p285 = scmp.ne.s32.totalorder %s273, %s274
    %p286 = scmp.eq.s32.totalorder %s24, 1
    %p287 = por %p285, %p286
    %p289 = scmp.ne.s32.totalorder %s274, %s288
    %p290 = scmp.eq.s32.totalorder %s24, 0
    %p291 = por %p289, %p290
    %s292 = ssub.s32 %s25, %s37
    %s293 = ssub.s32 %s26, %s33
    %s294 = sor.u32 %s292, %s293
    %p295 = scmp.eq.s32.totalorder %s294, 0
    %s297 = sadd.s32 %s296, 1
    %s298 = scalar_select %p295, %s296, %s297
    %p301 = pneg %p295
    %p302 = scmp.eq.s32.totalorder %s18, 1
    %p303 = por %p301, %p302
    %p304 = scmp.ne.s32.totalorder %s296, %s299
    %p305 = scmp.eq.s32.totalorder %s18, 0
    %p306 = por %p304, %p305
    %p307 = scmp.ne.s32.totalorder %s296, %s299
    %p308 = scmp.eq.s32.totalorder %s23, 1
    %p309 = por %p307, %p308
    %p310 = scmp.ne.s32.totalorder %s299, %s300
    %p311 = scmp.eq.s32.totalorder %s23, 0
    %p312 = por %p310, %p311
    %p313 = scmp.ne.s32.totalorder %s299, %s300
    %p314 = scmp.eq.s32.totalorder %s24, 1
    %p315 = por %p313, %p314
    %p317 = scmp.ne.s32.totalorder %s300, %s316
    %p318 = scmp.eq.s32.totalorder %s24, 0
    %p319 = por %p317, %p318
    %s320 = ssub.s32 %s25, %s37
    %s321 = ssub.s32 %s26, %s33
    %s322 = sor.u32 %s320, %s321
    %p323 = scmp.eq.s32.totalorder %s322, 0
    %s325 = sadd.s32 %s324, 1
    %s326 = scalar_select %p323, %s324, %s325
    %p329 = pneg %p323
    %p330 = scmp.eq.s32.totalorder %s18, 1
    %p331 = por %p329, %p330
    %p332 = scmp.ne.s32.totalorder %s324, %s327
    %p333 = scmp.eq.s32.totalorder %s18, 0
    %p334 = por %p332, %p333
    %p335 = scmp.ne.s32.totalorder %s324, %s327
    %p336 = scmp.eq.s32.totalorder %s23, 1
    %p337 = por %p335, %p336
    %p338 = scmp.ne.s32.totalorder %s327, %s328
    %p339 = scmp.eq.s32.totalorder %s23, 0
    %p340 = por %p338, %p339
    %p341 = scmp.ne.s32.totalorder %s327, %s328
    %p342 = scmp.eq.s32.totalorder %s24, 1
    %p343 = por %p341, %p342
    %p345 = scmp.ne.s32.totalorder %s328, %s344
    %p346 = scmp.eq.s32.totalorder %s24, 0
    %p347 = por %p345, %p346
    %p348 = scmp.le.s32.totalorder 1, %s18
    %p349 = scmp.lt.s32.totalorder %s18, 3
    %p350 = pnand %p348, %p349
    %p351 = pneg %p350
    // Predicated region
    $region9: #{tpu_custom_call.1} parent=5 // pred_check
      _
    $region10: #{tpu_custom_call.1} parent=5 // pred_check_branch
      %353 = sbr.rel (%p350) target = $region12
    $region11: #{tpu_custom_call.1} parent=5 // pred_region
      %s354 = ssub.s32 %s18, 1
      // Predicated region
      $region13: #{tpu_custom_call.1} parent=11 // pred_check
        %p355 = pneg %p179
      $region14: #{tpu_custom_call.1} parent=11 // pred_check_branch
        %357 = sbr.rel (%p355) target = $region16
      $region15: #{tpu_custom_call.1} parent=11 // pred_region
        _
      $region16: #{tpu_custom_call.1} parent=11 // pred_fallthru
        _
      // Predicated region
      $region17: #{tpu_custom_call.1} parent=11 // pred_check
        %p358 = pneg %p200
      $region18: #{tpu_custom_call.1} parent=11 // pred_check_branch
        %360 = sbr.rel (%p358) target = $region20
      $region19: #{tpu_custom_call.1} parent=11 // pred_region
        _
      $region20: #{tpu_custom_call.1} parent=11 // pred_fallthru
        _
      // Predicated region
      $region21: #{tpu_custom_call.1} parent=11 // pred_check
        %p361 = pneg %p221
      $region22: #{tpu_custom_call.1} parent=11 // pred_check_branch
        %363 = sbr.rel (%p361) target = $region24
      $region23: #{tpu_custom_call.1} parent=11 // pred_region
        _
      $region24: #{tpu_custom_call.1} parent=11 // pred_fallthru
        _
      // Predicated region
      $region25: #{tpu_custom_call.1} parent=11 // pred_check
        %p364 = pneg %p242
      $region26: #{tpu_custom_call.1} parent=11 // pred_check_branch
        %366 = sbr.rel (%p364) target = $region28
      $region27: #{tpu_custom_call.1} parent=11 // pred_region
        _
      $region28: #{tpu_custom_call.1} parent=11 // pred_fallthru
        _
      // Predicated region
      $region29: #{tpu_custom_call.1} parent=11 // pred_check
        %p367 = pneg %p263
      $region30: #{tpu_custom_call.1} parent=11 // pred_check_branch
        %369 = sbr.rel (%p367) target = $region32
      $region31: #{tpu_custom_call.1} parent=11 // pred_region
        _
      $region32: #{tpu_custom_call.1} parent=11 // pred_fallthru
        _
      // Predicated region
      $region33: #{tpu_custom_call.1} parent=11 // pred_check
        %p370 = pneg %p284
      $region34: #{tpu_custom_call.1} parent=11 // pred_check_branch
        %372 = sbr.rel (%p370) target = $region36
      $region35: #{tpu_custom_call.1} parent=11 // pred_region
        _
      $region36: #{tpu_custom_call.1} parent=11 // pred_fallthru
        _
    $region12: #{tpu_custom_call.1} parent=5 // pred_fallthru
      _
    %p373 = scmp.lt.s32.totalorder %s18, 2
    // Predicated region
    $region37: #{tpu_custom_call.1} parent=5 // pred_check
      %p374 = pneg %p373
    $region38: #{tpu_custom_call.1} parent=5 // pred_check_branch
      %376 = sbr.rel (%p374) target = $region40
    $region39: #{tpu_custom_call.1} parent=5 // pred_region
      // Predicated region
      $region41: #{tpu_custom_call.1} parent=39 // pred_check
        %p377 = pneg %p52
      $region42: #{tpu_custom_call.1} parent=39 // pred_check_branch
        %379 = sbr.rel (%p377) target = $region44
      $region43: #{tpu_custom_call.1} parent=39 // pred_region
        %s380 = smul.u32 2, %s26
        %p381 = scmp.lt.s32.totalorder %s25, 1
        %s382 = scalar_select %p381, %s25, 1
        %p383 = scmp.lt.s32.totalorder %s380, 1
        %s384 = scalar_select %p383, %s380, 1
        %s385 = smul.addr %s382, 2
        %s386 = sadd.s32 %s384, %s385
        %s387 = smul.addr %s386, 8
        %s388 = scalar_lea.vmem %s0, %s387
        %s389 = smul.u32 2, %s26
      $region44: #{tpu_custom_call.1} parent=39 // pred_fallthru
        _
      // Predicated region
      $region45: #{tpu_custom_call.1} parent=39 // pred_check
        %p390 = pneg %p80
      $region46: #{tpu_custom_call.1} parent=39 // pred_check_branch
        %392 = sbr.rel (%p390) target = $region48
      $region47: #{tpu_custom_call.1} parent=39 // pred_region
        %s393 = smul.u32 2, %s26
        %p394 = scmp.lt.s32.totalorder %s25, 1
        %s395 = scalar_select %p394, %s25, 1
        %p396 = scmp.lt.s32.totalorder %s393, 1
        %s397 = scalar_select %p396, %s393, 1
        %s398 = smul.addr %s395, 2
        %s399 = sadd.s32 %s397, %s398
        %s400 = smul.addr %s399, 8
        %s401 = scalar_lea.vmem %s1, %s400
        %s402 = smul.u32 2, %s26
      $region48: #{tpu_custom_call.1} parent=39 // pred_fallthru
        _
      // Predicated region
      $region49: #{tpu_custom_call.1} parent=39 // pred_check
        %p403 = pneg %p116
      $region50: #{tpu_custom_call.1} parent=39 // pred_check_branch
        %405 = sbr.rel (%p403) target = $region52
      $region51: #{tpu_custom_call.1} parent=39 // pred_region
        %s406 = smul.u32 %s26, 2
        %s407 = ssub.s32 %s406, 1
        %p408 = scmp.gt.s32.totalorder %s407, 0
        %s409 = scalar_select %p408, %s407, 0
        %p410 = scmp.lt.s32.totalorder %s25, 1
        %s411 = scalar_select %p410, %s25, 1
        %p412 = scmp.lt.s32.totalorder %s409, 1
        %s413 = scalar_select %p412, %s409, 1
        %s414 = smul.addr %s411, 2
        %s415 = sadd.s32 %s413, %s414
        %s416 = smul.addr %s415, 8
        %s417 = scalar_lea.vmem %s2, %s416
        %s418 = smul.u32 %s26, 2
        %s419 = ssub.s32 %s418, 1
        %p420 = scmp.gt.s32.totalorder %s419, 0
        %s421 = scalar_select %p420, %s419, 0
      $region52: #{tpu_custom_call.1} parent=39 // pred_fallthru
        _
      // Predicated region
      $region53: #{tpu_custom_call.1} parent=39 // pred_check
        %p422 = pneg %p152
      $region54: #{tpu_custom_call.1} parent=39 // pred_check_branch
        %424 = sbr.rel (%p422) target = $region56
      $region55: #{tpu_custom_call.1} parent=39 // pred_region
        %s425 = smul.u32 %s26, 2
        %s426 = ssub.s32 %s425, 1
        %p427 = scmp.gt.s32.totalorder %s426, 0
        %s428 = scalar_select %p427, %s426, 0
        %p429 = scmp.lt.s32.totalorder %s25, 1
        %s430 = scalar_select %p429, %s25, 1
        %p431 = scmp.lt.s32.totalorder %s428, 1
        %s432 = scalar_select %p431, %s428, 1
        %s433 = smul.addr %s430, 2
        %s434 = sadd.s32 %s432, %s433
        %s435 = smul.addr %s434, 8
        %s436 = scalar_lea.vmem %s3, %s435
        %s437 = smul.u32 %s26, 2
        %s438 = ssub.s32 %s437, 1
        %p439 = scmp.gt.s32.totalorder %s438, 0
        %s440 = scalar_select %p439, %s438, 0
      $region56: #{tpu_custom_call.1} parent=39 // pred_fallthru
        _
    $region40: #{tpu_custom_call.1} parent=5 // pred_fallthru
      _
    %p441 = scmp.le.s32.totalorder 1, %s18
    %p442 = scmp.lt.s32.totalorder %s18, 3
    %p443 = pnand %p441, %p442
    %p444 = pneg %p443
    // Predicated region
    $region57: #{tpu_custom_call.1} parent=5 // pred_check
      _
    $region58: #{tpu_custom_call.1} parent=5 // pred_check_branch
      %446 = sbr.rel (%p443) target = $region60
    $region59: #{tpu_custom_call.1} parent=5 // pred_region
      %s447 = ssub.s32 %s18, 1
      %s448 = smul.u32 2, %s28
      %p449 = scmp.lt.s32.totalorder %s27, 1
      %s450 = scalar_select %p449, %s27, 1
      %p451 = scmp.lt.s32.totalorder %s448, 1
      %s452 = scalar_select %p451, %s448, 1
      %s453 = smul.addr %s450, 2
      %s454 = sadd.s32 %s452, %s453
      %s455 = smul.addr %s454, 8
      %s456 = scalar_lea.vmem %s0, %s455
      %p457 = pneg %p58
      %p458 = pneg %p55
      %s459 = smul.u32 2, %s28
      %p460 = scmp.lt.s32.totalorder %s27, 1
      %s461 = scalar_select %p460, %s27, 1
      %p462 = scmp.lt.s32.totalorder %s459, 1
      %s463 = scalar_select %p462, %s459, 1
      %s464 = smul.addr %s461, 2
      %s465 = sadd.s32 %s463, %s464
      %s466 = smul.addr %s465, 8
      %s467 = scalar_lea.vmem %s1, %s466
      %p468 = pneg %p86
      %p469 = pneg %p83
      %s470 = smul.u32 %s28, 2
      %s471 = ssub.s32 %s470, 1
      %p472 = scmp.gt.s32.totalorder %s471, 0
      %s473 = scalar_select %p472, %s471, 0
      %p474 = scmp.lt.s32.totalorder %s27, 1
      %s475 = scalar_select %p474, %s27, 1
      %p476 = scmp.lt.s32.totalorder %s473, 1
      %s477 = scalar_select %p476, %s473, 1
      %s478 = smul.addr %s475, 2
      %s479 = sadd.s32 %s477, %s478
      %s480 = smul.addr %s479, 8
      %s481 = scalar_lea.vmem %s2, %s480
      %p482 = pneg %p122
      %p483 = pneg %p119
      %s484 = smul.u32 %s28, 2
      %s485 = ssub.s32 %s484, 1
      %p486 = scmp.gt.s32.totalorder %s485, 0
      %s487 = scalar_select %p486, %s485, 0
      %p488 = scmp.lt.s32.totalorder %s27, 1
      %s489 = scalar_select %p488, %s27, 1
      %p490 = scmp.lt.s32.totalorder %s487, 1
      %s491 = scalar_select %p490, %s487, 1
      %s492 = smul.addr %s489, 2
      %s493 = sadd.s32 %s491, %s492
      %s494 = smul.addr %s493, 8
      %s495 = scalar_lea.vmem %s3, %s494
      %p496 = pneg %p158
      %p497 = pneg %p155
      %p498 = pneg %p179
      %p499 = pneg %p176
      %p500 = pneg %p200
      %p501 = pneg %p197
      %p502 = pneg %p221
      %p503 = pneg %p218
      %p504 = pneg %p242
      %p505 = pneg %p239
      %p506 = pneg %p263
      %p507 = pneg %p260
      %p508 = pneg %p284
      %p509 = pneg %p281
      %p510 = pneg %p312
      %p511 = pneg %p309
      %s512 = smul.u32 2, %s28
      %p513 = scmp.lt.s32.totalorder %s27, 1
      %s514 = scalar_select %p513, %s27, 1
      %p515 = scmp.lt.s32.totalorder %s512, 1
      %s516 = scalar_select %p515, %s512, 1
      %s517 = smul.addr %s514, 2
      %s518 = sadd.s32 %s516, %s517
      %s519 = smul.addr %s518, 8
      %s520 = scalar_lea.vmem %s10, %s519
      %p521 = pneg %p340
      %p522 = pneg %p337
      %s523 = smul.u32 2, %s28
      %p524 = scmp.lt.s32.totalorder %s27, 1
      %s525 = scalar_select %p524, %s27, 1
      %p526 = scmp.lt.s32.totalorder %s523, 1
      %s527 = scalar_select %p526, %s523, 1
      %s528 = smul.addr %s525, 2
      %s529 = sadd.s32 %s527, %s528
      %s530 = smul.addr %s529, 8
      %s531 = scalar_lea.vmem %s11, %s530
      %s532 = smul.u32 2, %s28
      %p533 = scmp.lt.s32.totalorder %s27, 1
      %s534 = scalar_select %p533, %s27, 1
      %p535 = scmp.lt.s32.totalorder %s532, 1
      %s536 = scalar_select %p535, %s532, 1
      %s537 = smul.addr %s534, 2
      %s538 = sadd.s32 %s536, %s537
      %s539 = smul.addr %s538, 8
      %s540 = scalar_lea.vmem %s0, %s539
      %s541 = smul.u32 2, %s28
      %s542 = smul.u32 2, %s28
      %p543 = scmp.lt.s32.totalorder %s27, 1
      %s544 = scalar_select %p543, %s27, 1
      %p545 = scmp.lt.s32.totalorder %s542, 1
      %s546 = scalar_select %p545, %s542, 1
      %s547 = smul.addr %s544, 2
      %s548 = sadd.s32 %s546, %s547
      %s549 = smul.addr %s548, 8
      %s550 = scalar_lea.vmem %s1, %s549
      %s551 = smul.u32 2, %s28
      %s552 = smul.u32 %s28, 2
      %s553 = ssub.s32 %s552, 1
      %p554 = scmp.gt.s32.totalorder %s553, 0
      %s555 = scalar_select %p554, %s553, 0
      %p556 = scmp.lt.s32.totalorder %s27, 1
      %s557 = scalar_select %p556, %s27, 1
      %p558 = scmp.lt.s32.totalorder %s555, 1
      %s559 = scalar_select %p558, %s555, 1
      %s560 = smul.addr %s557, 2
      %s561 = sadd.s32 %s559, %s560
      %s562 = smul.addr %s561, 8
      %s563 = scalar_lea.vmem %s2, %s562
      %s564 = smul.u32 %s28, 2
      %s565 = ssub.s32 %s564, 1
      %p566 = scmp.gt.s32.totalorder %s565, 0
      %s567 = scalar_select %p566, %s565, 0
      %s568 = smul.u32 %s28, 2
      %s569 = ssub.s32 %s568, 1
      %p570 = scmp.gt.s32.totalorder %s569, 0
      %s571 = scalar_select %p570, %s569, 0
      %p572 = scmp.lt.s32.totalorder %s27, 1
      %s573 = scalar_select %p572, %s27, 1
      %p574 = scmp.lt.s32.totalorder %s571, 1
      %s575 = scalar_select %p574, %s571, 1
      %s576 = smul.addr %s573, 2
      %s577 = sadd.s32 %s575, %s576
      %s578 = smul.addr %s577, 8
      %s579 = scalar_lea.vmem %s3, %s578
      %s580 = smul.u32 %s28, 2
      %s581 = ssub.s32 %s580, 1
      %p582 = scmp.gt.s32.totalorder %s581, 0
      %s583 = scalar_select %p582, %s581, 0
      %s584 = smul.u32 2, %s28
      %p585 = scmp.lt.s32.totalorder %s27, 1
      %s586 = scalar_select %p585, %s27, 1
      %p587 = scmp.lt.s32.totalorder %s584, 1
      %s588 = scalar_select %p587, %s584, 1
      %s589 = smul.addr %s586, 2
      %s590 = sadd.s32 %s588, %s589
      %s591 = smul.addr %s590, 8
      %s592 = scalar_lea.vmem %s10, %s591
      %s593 = smul.u32 2, %s28
      %s594 = smul.u32 2, %s28
      %p595 = scmp.lt.s32.totalorder %s27, 1
      %s596 = scalar_select %p595, %s27, 1
      %p597 = scmp.lt.s32.totalorder %s594, 1
      %s598 = scalar_select %p597, %s594, 1
      %s599 = smul.addr %s596, 2
      %s600 = sadd.s32 %s598, %s599
      %s601 = smul.addr %s600, 8
      %s602 = scalar_lea.vmem %s11, %s601
      %s603 = smul.u32 2, %s28
      %v605 = vld [vmem:[%s540] sm:$0xff]
      %v606 = vld [vmem:[%s540 + $0x8] sm:$0xff]
      %v607 = vld [vmem:[%s550] sm:$0xff]
      %v608 = vld [vmem:[%s550 + $0x8] sm:$0xff]
      %p609 = scmp.eq.s32.totalorder %s28, 0
      %v610 = vld [vmem:[%s563] sm:$0xff]
      %s611 = scalar_select %p609, 1, 0
      %v612 = vstv %s611
      %vm613 = vcmp.eq.s32.totalorder %v612, 1
      %v614 = vsel %vm613, 0.0, %v610
      %v615 = vld [vmem:[%s579] sm:$0xff]
      %v616 = vsel %vm613, 0.0, %v615
      %vm617 = vcmask 64517
      %618 = vst.msk [vmem:[#allocation2 - $0x5] sm:$0xe0] %vm617, %v614
      %619 = vst.msk [vmem:[#allocation3 - $0x5] sm:$0xe0] %vm617, %v616
      %vm620 = vcmask 64512
      %621 = vst.msk [vmem:[#allocation2 + $0x3] sm:$0xff] %vm620, %v605
      %vm622 = vcmask 61440
      %623 = vst.msk [vmem:[#allocation2 + $0xb] sm:$0x1f] %vm622, %v606
      %624 = vst.msk [vmem:[#allocation3 + $0x3] sm:$0xff] %vm620, %v607
      %625 = vst.msk [vmem:[#allocation3 + $0xb] sm:$0x1f] %vm622, %v608
      %627 = vrot.lane.b32.xlu0 %v614, 8
      %v628 = vpop.permute.xlu0 %627
      %vm630 = vcmask 130118
      %631 = vst.msk [vmem:[#allocation2 - $0x6] sm:$0xc0] %vm630, %v628
      %633 = vrot.lane.b32.xlu0 %v616, 8
      %v634 = vpop.permute.xlu0 %633
      %636 = vst.msk [vmem:[#allocation3 - $0x6] sm:$0xc0] %vm630, %v634
      %639 = vrot.lane.b32.xlu0 %v605, 8
      %v640 = vpop.permute.xlu0 %639
      %641 = vrot.lane.b32.xlu0 %v606, 8
      %v642 = vpop.permute.xlu0 %641
      %vm645 = vcmask 130112
      %646 = vst.msk [vmem:[#allocation2 + $0x2] sm:$0xff] %vm645, %v640
      %vm647 = vcmask 128064
      %648 = vst.msk [vmem:[#allocation2 + $0xa] sm:$0x3f] %vm647, %v642
      %651 = vrot.lane.b32.xlu0 %v607, 8
      %v652 = vpop.permute.xlu0 %651
      %653 = vrot.lane.b32.xlu0 %v608, 8
      %v654 = vpop.permute.xlu0 %653
      %657 = vst.msk [vmem:[#allocation3 + $0x2] sm:$0xff] %vm645, %v652
      %658 = vst.msk [vmem:[#allocation3 + $0xa] sm:$0x3f] %vm647, %v654
      %659 = vrot.lane.b32.xlu0 %v614, 16
      %v660 = vpop.permute.xlu0 %659
      %vm662 = vcmask 195719
      %663 = vst.msk [vmem:[#allocation2 - $0x7] sm:$0x80] %vm662, %v660
      %664 = vrot.lane.b32.xlu0 %v616, 16
      %v665 = vpop.permute.xlu0 %664
      %667 = vst.msk [vmem:[#allocation3 - $0x7] sm:$0x80] %vm662, %v665
      %668 = vrot.lane.b32.xlu0 %v605, 16
      %v669 = vpop.permute.xlu0 %668
      %670 = vrot.lane.b32.xlu0 %v606, 16
      %v671 = vpop.permute.xlu0 %670
      %vm674 = vcmask 195712
      %675 = vst.msk [vmem:[#allocation2 + $0x1] sm:$0xff] %vm674, %v669
      %vm676 = vcmask 194688
      %677 = vst.msk [vmem:[#allocation2 + $0x9] sm:$0x7f] %vm676, %v671
      %678 = vrot.lane.b32.xlu0 %v607, 16
      %v679 = vpop.permute.xlu0 %678
      %680 = vrot.lane.b32.xlu0 %v608, 16
      %v681 = vpop.permute.xlu0 %680
      %684 = vst.msk [vmem:[#allocation3 + $0x1] sm:$0xff] %vm674, %v679
      %685 = vst.msk [vmem:[#allocation3 + $0x9] sm:$0x7f] %vm676, %v681
      %686 = vrot.lane.b32.xlu0 %v605, 24
      %v687 = vpop.permute.xlu0 %686
      %688 = vrot.lane.b32.xlu0 %v606, 24
      %v689 = vpop.permute.xlu0 %688
      %vm692 = vcmask 261312
      %693 = vst.msk [vmem:[#allocation2] sm:$0xff] %vm692, %v687
      %694 = vst.msk [vmem:[#allocation2 + $0x8] sm:$0xff] %vm692, %v689
      %695 = vrot.lane.b32.xlu0 %v607, 24
      %v696 = vpop.permute.xlu0 %695
      %697 = vrot.lane.b32.xlu0 %v608, 24
      %v698 = vpop.permute.xlu0 %697
      %701 = vst.msk [vmem:[#allocation3] sm:$0xff] %vm692, %v696
      %702 = vst.msk [vmem:[#allocation3 + $0x8] sm:$0xff] %vm692, %v698
      %v703 = vld [vmem:[#allocation2] sm:$0xff]
      %v704 = vld [vmem:[#allocation2 + $0x8] sm:$0xff]
      %v705 = vpack.c.bf16 %v704, %v703
      %v706 = vld [vmem:[%s4] sm:$0xf]
      %v707 = vld [vmem:[%s4 + $0x4] sm:$0xf]
      %v708 = vld [vmem:[%s4 + $0x8] sm:$0xf]
      %v709 = vld [vmem:[%s4 + $0xc] sm:$0xf]
      %v710 = vld [vmem:[%s6] sm:$0x1]
      %v712 = vlaneseq
      %v713 = vshrl.u32 %v712, 7
      %v714 = vsub.s32 0, %v713
      %v715 = vrot.slane %v710, %v714
      %v721 = vunpack.c.l.b16 %v706
      %v722 = vunpack.c.l.b16 %v707
      %v723 = vunpack.c.l.b16 %v708
      %v724 = vunpack.c.l.b16 %v709
      %v725 = vpack.c.b16 %v722, %v721
      %v726 = vpack.c.b16 %v724, %v723
      %vm729 = vcmask 261120
      %v731 = vsel %vm729, %v705, 0
      %733 = vmatprep.subr.bf16.mxu0 0
      %734 = vmatpush1.bf16.msra.mxu0 0
      %735 = vmatprep.subr.bf16.mxu0 0
      %736 = vmatpush1.bf16.msra.mxu0 0
      %737 = vmatprep.subr.bf16.mxu0 0
      %738 = vmatpush1.bf16.msra.mxu0 0
      %739 = vmatprep.subr.bf16.mxu0 0
      %740 = vmatpush1.bf16.msra.mxu0 0
      %741 = vmatprep.subr.bf16.mxu0 0
      %742 = vmatpush1.bf16.msra.mxu0 0
      %743 = vmatprep.subr.bf16.mxu0 0
      %744 = vmatpush1.bf16.msra.mxu0 0
      %745 = vmatprep.subr.bf16.mxu0 0
      %746 = vmatpush1.bf16.msra.mxu0 %v726
      %747 = vmatprep.subr.bf16.mxu0 0
      %748 = vmatpush1.bf16.msra.mxu0 %v725
      %749 = vmatprep.subr.bf16.mxu0 0
      %750 = vmatpush2.bf16.msra.mxu0 0
      %751 = vmatprep.subr.bf16.mxu0 0
      %752 = vmatpush2.bf16.msra.mxu0 0
      %753 = vmatprep.subr.bf16.mxu0 0
      %754 = vmatpush2.bf16.msra.mxu0 0
      %755 = vmatprep.subr.bf16.mxu0 0
      %756 = vmatpush2.bf16.msra.mxu0 0
      %757 = vmatprep.subr.bf16.mxu0 0
      %758 = vmatpush2.bf16.msra.mxu0 0
      %759 = vmatprep.subr.bf16.mxu0 0
      %760 = vmatpush2.bf16.msra.mxu0 0
      %761 = vmatprep.subr.bf16.mxu0 0
      %762 = vmatpush2.bf16.msra.mxu0 0
      %763 = vmatprep.subr.bf16.mxu0 0
      %764 = vmatpush2.bf16.msra.mxu0 0
      %765 = vmatprep.mubr.bf16.mxu0 0
      %766 = vmatmul.mubr.bf16.gmra.mxu0 %v731
      %v767 = vpop.f32.mrf.mxu0
      %v768 = vadd.f32 %v715, %v767
      %v769 = vpop.f32.mrf.mxu0
      %v770 = vpop.f32.mrf.mxu0
      %v771 = vadd.f32 %v715, %v770
      %v772 = vpop.f32.mrf.mxu0
      %773 = vdwg.mxu0
      %v774 = vld [vmem:[#allocation3] sm:$0xff]
      %v775 = vld [vmem:[#allocation3 + $0x8] sm:$0xff]
      %v776 = vpack.c.bf16 %v775, %v774
      %v777 = vld [vmem:[%s5] sm:$0xf]
      %v778 = vld [vmem:[%s5 + $0x4] sm:$0xf]
      %v779 = vld [vmem:[%s5 + $0x8] sm:$0xf]
      %v780 = vld [vmem:[%s5 + $0xc] sm:$0xf]
      %v781 = vld [vmem:[%s7] sm:$0x1]
      %v783 = vlaneseq
      %v784 = vshrl.u32 %v783, 7
      %v785 = vsub.s32 0, %v784
      %v786 = vrot.slane %v781, %v785
      %v792 = vunpack.c.l.b16 %v777
      %v793 = vunpack.c.l.b16 %v778
      %v794 = vunpack.c.l.b16 %v779
      %v795 = vunpack.c.l.b16 %v780
      %v796 = vpack.c.b16 %v793, %v792
      %v797 = vpack.c.b16 %v795, %v794
      %v801 = vsel %vm729, %v776, 0
      %803 = vmatprep.subr.bf16.mxu0 0
      %804 = vmatpush1.bf16.msra.mxu0 0
      %805 = vmatprep.subr.bf16.mxu0 0
      %806 = vmatpush1.bf16.msra.mxu0 0
      %807 = vmatprep.subr.bf16.mxu0 0
      %808 = vmatpush1.bf16.msra.mxu0 0
      %809 = vmatprep.subr.bf16.mxu0 0
      %810 = vmatpush1.bf16.msra.mxu0 0
      %811 = vmatprep.subr.bf16.mxu0 0
      %812 = vmatpush1.bf16.msra.mxu0 0
      %813 = vmatprep.subr.bf16.mxu0 0
      %814 = vmatpush1.bf16.msra.mxu0 0
      %815 = vmatprep.subr.bf16.mxu0 0
      %816 = vmatpush1.bf16.msra.mxu0 %v797
      %817 = vmatprep.subr.bf16.mxu0 0
      %818 = vmatpush1.bf16.msra.mxu0 %v796
      %819 = vmatprep.subr.bf16.mxu0 0
      %820 = vmatpush2.bf16.msra.mxu0 0
      %821 = vmatprep.subr.bf16.mxu0 0
      %822 = vmatpush2.bf16.msra.mxu0 0
      %823 = vmatprep.subr.bf16.mxu0 0
      %824 = vmatpush2.bf16.msra.mxu0 0
      %825 = vmatprep.subr.bf16.mxu0 0
      %826 = vmatpush2.bf16.msra.mxu0 0
      %827 = vmatprep.subr.bf16.mxu0 0
      %828 = vmatpush2.bf16.msra.mxu0 0
      %829 = vmatprep.subr.bf16.mxu0 0
      %830 = vmatpush2.bf16.msra.mxu0 0
      %831 = vmatprep.subr.bf16.mxu0 0
      %832 = vmatpush2.bf16.msra.mxu0 0
      %833 = vmatprep.subr.bf16.mxu0 0
      %834 = vmatpush2.bf16.msra.mxu0 0
      %835 = vmatprep.mubr.bf16.mxu0 0
      %836 = vmatmul.mubr.bf16.gmra.mxu0 %v801
      %v837 = vpop.f32.mrf.mxu0
      %v838 = vadd.f32 %v786, %v837
      %v839 = vpop.f32.mrf.mxu0
      %v840 = vpop.f32.mrf.mxu0
      %v841 = vadd.f32 %v786, %v840
      %v842 = vpop.f32.mrf.mxu0
      %843 = vdwg.mxu0
      %v844 = vld [vmem:[%s8] sm:$0x1]
      %v846 = vlaneseq
      %v847 = vshrl.u32 %v846, 7
      %v848 = vsub.s32 0, %v847
      %v849 = vrot.slane %v844, %v848
      %v851 = vmul.f32 %v605, %v849
      %v852 = vmul.f32 %v606, %v849
      %v853 = vld [vmem:[%s9] sm:$0x1]
      %v855 = vlaneseq
      %v856 = vshrl.u32 %v855, 7
      %v857 = vsub.s32 0, %v856
      %v858 = vrot.slane %v853, %v857
      %v860 = vadd.f32 %v851, %v858
      %v861 = vadd.f32 %v852, %v858
      %s862 = scalar_lea.vmem %s8, 1
      %v863 = vld [vmem:[%s862] sm:$0x1]
      %v865 = vlaneseq
      %v866 = vshrl.u32 %v865, 7
      %v867 = vsub.s32 0, %v866
      %v868 = vrot.slane %v863, %v867
      %v870 = vmul.f32 %v605, %v868
      %v871 = vmul.f32 %v606, %v868
      %s872 = scalar_lea.vmem %s9, 1
      %v873 = vld [vmem:[%s872] sm:$0x1]
      %v875 = vlaneseq
      %v876 = vshrl.u32 %v875, 7
      %v877 = vsub.s32 0, %v876
      %v878 = vrot.slane %v873, %v877
      %v880 = vadd.f32 %v870, %v878
      %v881 = vadd.f32 %v871, %v878
      %s882 = scalar_lea.vmem %s8, 2
      %v883 = vld [vmem:[%s882] sm:$0x1]
      %v885 = vlaneseq
      %v886 = vshrl.u32 %v885, 7
      %v887 = vsub.s32 0, %v886
      %v888 = vrot.slane %v883, %v887
      %v890 = vmul.f32 %v605, %v888
      %v891 = vmul.f32 %v606, %v888
      %s892 = scalar_lea.vmem %s9, 2
      %v893 = vld [vmem:[%s892] sm:$0x1]
      %v895 = vlaneseq
      %v896 = vshrl.u32 %v895, 7
      %v897 = vsub.s32 0, %v896
      %v898 = vrot.slane %v893, %v897
      %v900 = vadd.f32 %v890, %v898
      %v901 = vadd.f32 %v891, %v898
      %v902 = vmax.f32 %v860, %v880
      %v903 = vmax.f32 %v861, %v881
      %v904 = vmax.f32 %v902, %v900
      %v905 = vmax.f32 %v903, %v901
      %v906 = vsub.f32 %v860, %v904
      %v907 = vsub.f32 %v861, %v905
      %v908 = vmul.f32 %v906, 1.442695
      %v909 = vpow.pop %v908
      %v910 = vmul.f32 %v907, 1.442695
      %v911 = vpow.pop %v910
      %v912 = vadd.f32 %v909, 0.0
      %v913 = vadd.f32 %v911, 0.0
      %v914 = vmul.f32 %v909, %v768
      %v915 = vmul.f32 %v911, %v771
      %v916 = vadd.f32 %v914, 0.0
      %v917 = vadd.f32 %v915, 0.0
      %v918 = vmul.f32 %v909, %v838
      %v919 = vmul.f32 %v911, %v841
      %v920 = vadd.f32 %v918, 0.0
      %v921 = vadd.f32 %v919, 0.0
      %v922 = vsub.f32 %v880, %v904
      %v923 = vsub.f32 %v881, %v905
      %v924 = vmul.f32 %v922, 1.442695
      %v925 = vpow.pop %v924
      %v926 = vmul.f32 %v923, 1.442695
      %v927 = vpow.pop %v926
      %v928 = vadd.f32 %v912, %v925
      %v929 = vadd.f32 %v913, %v927
      %932 = vrot.lane.b32.xlu0 %v768, 120
      %v933 = vpop.permute.xlu0 %932
      %934 = vrot.lane.b32.xlu0 %v771, 120
      %v935 = vpop.permute.xlu0 %934
      %v938 = vmul.f32 %v925, %v933
      %v939 = vmul.f32 %v927, %v935
      %v940 = vadd.f32 %v916, %v938
      %v941 = vadd.f32 %v917, %v939
      %944 = vrot.lane.b32.xlu0 %v838, 120
      %v945 = vpop.permute.xlu0 %944
      %946 = vrot.lane.b32.xlu0 %v841, 120
      %v947 = vpop.permute.xlu0 %946
      %v950 = vmul.f32 %v925, %v945
      %v951 = vmul.f32 %v927, %v947
      %v952 = vadd.f32 %v920, %v950
      %v953 = vadd.f32 %v921, %v951
      %v954 = vsub.f32 %v900, %v904
      %v955 = vsub.f32 %v901, %v905
      %v956 = vmul.f32 %v954, 1.442695
      %v957 = vpow.pop %v956
      %v958 = vmul.f32 %v955, 1.442695
      %v959 = vpow.pop %v958
      %v960 = vadd.f32 %v928, %v957
      %v961 = vadd.f32 %v929, %v959
      %962 = vrot.lane.b32.xlu0 %v768, 112
      %v963 = vpop.permute.xlu0 %962
      %964 = vrot.lane.b32.xlu0 %v771, 112
      %v965 = vpop.permute.xlu0 %964
      %v968 = vmul.f32 %v957, %v963
      %v969 = vmul.f32 %v959, %v965
      %v970 = vadd.f32 %v940, %v968
      %v971 = vadd.f32 %v941, %v969
      %972 = vrot.lane.b32.xlu0 %v838, 112
      %v973 = vpop.permute.xlu0 %972
      %974 = vrot.lane.b32.xlu0 %v841, 112
      %v975 = vpop.permute.xlu0 %974
      %v978 = vmul.f32 %v957, %v973
      %v979 = vmul.f32 %v959, %v975
      %v980 = vadd.f32 %v952, %v978
      %v981 = vadd.f32 %v953, %v979
      %v982 = vrcp.pop %v960
      %v983 = vrcp.pop %v961
      %v984 = vmul.f32 %v970, %v982
      %v985 = vmul.f32 %v971, %v983
      %986 = vst.msk [vmem:[%s592] sm:$0xff] %vm620, %v984
      %987 = vst.msk [vmem:[%s592 + $0x8] sm:$0xff] %vm620, %v985
      %v988 = vmul.f32 %v980, %v982
      %v989 = vmul.f32 %v981, %v983
      %990 = vst.msk [vmem:[%s602] sm:$0xff] %vm620, %v988
      %991 = vst.msk [vmem:[%s602 + $0x8] sm:$0xff] %vm620, %v989
      %s992 = smul.u32 2, %s28
      %p993 = scmp.lt.s32.totalorder %s27, 1
      %s994 = scalar_select %p993, %s27, 1
      %p995 = scmp.lt.s32.totalorder %s992, 1
      %s996 = scalar_select %p995, %s992, 1
      %s997 = smul.addr %s994, 2
      %s998 = sadd.s32 %s996, %s997
      %s999 = smul.addr %s998, 8
      %s1000 = scalar_lea.vmem %s10, %s999
      %s1001 = smul.u32 2, %s28
      %p1002 = scmp.lt.s32.totalorder %s27, 1
      %s1003 = scalar_select %p1002, %s27, 1
      %p1004 = scmp.lt.s32.totalorder %s1001, 1
      %s1005 = scalar_select %p1004, %s1001, 1
      %s1006 = smul.addr %s1003, 2
      %s1007 = sadd.s32 %s1005, %s1006
      %s1008 = smul.addr %s1007, 8
      %s1009 = scalar_lea.vmem %s11, %s1008
      // Predicated region
      $region61: #{tpu_custom_call.1} parent=59 // pred_check
        %p1010 = pneg %p309
      $region62: #{tpu_custom_call.1} parent=59 // pred_check_branch
        %1012 = sbr.rel (%p1010) target = $region64
      $region63: #{tpu_custom_call.1} parent=59 // pred_region
        %s1013 = smul.u32 2, %s28
      $region64: #{tpu_custom_call.1} parent=59 // pred_fallthru
        _
      // Predicated region
      $region65: #{tpu_custom_call.1} parent=59 // pred_check
        %p1014 = pneg %p337
      $region66: #{tpu_custom_call.1} parent=59 // pred_check_branch
        %1016 = sbr.rel (%p1014) target = $region68
      $region67: #{tpu_custom_call.1} parent=59 // pred_region
        %s1017 = smul.u32 2, %s28
      $region68: #{tpu_custom_call.1} parent=59 // pred_fallthru
        _
    $region60: #{tpu_custom_call.1} parent=5 // pred_fallthru
      _
    %p1018 = scmp.le.s32.totalorder 2, %s18
    // Predicated region
    $region69: #{tpu_custom_call.1} parent=5 // pred_check
      %p1019 = pneg %p1018
    $region70: #{tpu_custom_call.1} parent=5 // pred_check_branch
      %1021 = sbr.rel (%p1019) target = $region72
    $region71: #{tpu_custom_call.1} parent=5 // pred_region
      %s1022 = ssub.s32 %s18, 2
      // Predicated region
      $region73: #{tpu_custom_call.1} parent=71 // pred_check
        %p1023 = pneg %p315
      $region74: #{tpu_custom_call.1} parent=71 // pred_check_branch
        %1025 = sbr.rel (%p1023) target = $region76
      $region75: #{tpu_custom_call.1} parent=71 // pred_region
        %s1026 = smul.u32 2, %s30
        %p1027 = scmp.lt.s32.totalorder %s29, 1
        %s1028 = scalar_select %p1027, %s29, 1
        %p1029 = scmp.lt.s32.totalorder %s1026, 1
        %s1030 = scalar_select %p1029, %s1026, 1
        %s1031 = smul.addr %s1028, 2
        %s1032 = sadd.s32 %s1030, %s1031
        %s1033 = smul.addr %s1032, 8
        %s1034 = scalar_lea.vmem %s10, %s1033
      $region76: #{tpu_custom_call.1} parent=71 // pred_fallthru
        _
      // Predicated region
      $region77: #{tpu_custom_call.1} parent=71 // pred_check
        %p1035 = pneg %p343
      $region78: #{tpu_custom_call.1} parent=71 // pred_check_branch
        %1037 = sbr.rel (%p1035) target = $region80
      $region79: #{tpu_custom_call.1} parent=71 // pred_region
        %s1038 = smul.u32 2, %s30
        %p1039 = scmp.lt.s32.totalorder %s29, 1
        %s1040 = scalar_select %p1039, %s29, 1
        %p1041 = scmp.lt.s32.totalorder %s1038, 1
        %s1042 = scalar_select %p1041, %s1038, 1
        %s1043 = smul.addr %s1040, 2
        %s1044 = sadd.s32 %s1042, %s1043
        %s1045 = smul.addr %s1044, 8
        %s1046 = scalar_lea.vmem %s11, %s1045
      $region80: #{tpu_custom_call.1} parent=71 // pred_fallthru
        _
    $region72: #{tpu_custom_call.1} parent=5 // pred_fallthru
      _
  $region6: #{tpu_custom_call.1} parent=0 // loop_footer
    %s22 = sadd.s32 1, %s18
  $region7: #{tpu_custom_call.1} parent=0 // loop_footer_branch
    %17 = sbr.rel target = $region3
  $region8: #{tpu_custom_call.1} parent=0 // loop_exit
    _

</llo_original>
